<compile_context>
chip_gen: v6e
topology: v6e:2x2x1
jax: 0.10.0
libtpu: 0.0.40
codegen_flags: <defaults>
</compile_context>

<pallas_src>
import functools
import math

import jax
import jax.numpy as jnp
from jax.experimental import pallas as pl
from jax.experimental.pallas import tpu as pltpu


def _rate_adaption_kernel(idx_ref, x_ref, w_ref, o_ref, *, rate_num, Rmax):
    x = x_ref[0]                        # (Rmax, tile) f32
    idx = idx_ref[0]                    # (1, tile) int32, per-pixel rate id
    w = w_ref[...]                      # (C, K) packed weights+bias, K = rate_num*Rmax + rate_num

    tile = x.shape[-1]

    # One-hot rate masks, (rate_num, 1, tile).
    r_ids = jax.lax.broadcasted_iota(jnp.int32, (rate_num, 1, tile), 0)
    masks = (idx[None, :, :] == r_ids).astype(x.dtype)

    # Masked-stacked input: block r = x * (idx == r)  ->  (rate_num*Rmax, tile),
    # then append the mask rows themselves (they pick up the bias columns of w).
    xm = (masks * x[None, :, :]).reshape(rate_num * Rmax, tile)
    xk = jnp.concatenate([xm, masks.reshape(rate_num, tile)], axis=0)   # (K, tile)

    # Single MXU pass: weights, bias and rate selection all folded in.
    o_ref[0] = jnp.dot(w, xk, preferred_element_type=jnp.float32).astype(o_ref.dtype)


def rate_adaption_decoder(x, indexes, weight, bias, *, tile_hw=8192):
    """x: (B, Rmax, H, W) f32; indexes: (B*H*W,) int32. Returns (B, C, H, W)."""
    B, Rin, H, W = x.shape
    rate_num, Rmax, C = weight.shape
    assert Rin == Rmax, "input channel dim must equal max(rate_choice)"
    assert tile_hw >= 128 and tile_hw % 128 == 0, "tile_hw must be a multiple of 128"
    HW = H * W

    # Lane-dense tile: multiple of 128, no larger than the 128-padded HW extent.
    hw_pad128 = pl.cdiv(HW, 128) * 128
    tile = min(tile_hw, hw_pad128)
    if B == 1:
        # v7x megacore: make sure at least one parallel axis has >= 2 steps.
        half = max(128, pl.cdiv(pl.cdiv(HW, 2), 128) * 128)
        tile = min(tile, half)
    n_hw = pl.cdiv(HW, tile)

    # NCHW already flattens to the layout the kernel wants (no transpose, no pad).
    x_flat = x.reshape(B, Rmax, HW)
    idx_flat = indexes.astype(jnp.int32).reshape(B, 1, HW)

    # Pack weights + bias: row c, column r*Rmax + k holds weight[r, k, c];
    # the last rate_num columns hold bias[r, c].
    K = rate_num * Rmax + rate_num
    w_x = jnp.transpose(weight, (2, 0, 1)).reshape(C, rate_num * Rmax)   # (C, rate_num*Rmax)
    w_packed = jnp.concatenate([w_x, bias.T], axis=1)                    # (C, K)

    grid = (B, n_hw)
    kernel = functools.partial(_rate_adaption_kernel, rate_num=rate_num, Rmax=Rmax)

    out = pl.pallas_call(
        kernel,
        out_shape=jax.ShapeDtypeStruct((B, C, HW), x.dtype),
        grid=grid,
        in_specs=[
            pl.BlockSpec((1, 1, tile), lambda b, j: (b, 0, j)),      # indexes
            pl.BlockSpec((1, Rmax, tile), lambda b, j: (b, 0, j)),   # x
            pl.BlockSpec((C, K), lambda b, j: (0, 0)),               # packed W (+bias)
        ],
        out_specs=pl.BlockSpec((1, C, tile), lambda b, j: (b, 0, j)),
        compiler_params=pltpu.CompilerParams(
            dimension_semantics=("parallel", "parallel")),
    )(idx_flat, x_flat, w_packed)

    # (B, C, HW) -> NCHW; pure reshape, no copy, no slicing.
    return out.reshape(B, C, H, W)


def _reference(x, indexes, weight, bias):
    """Pure-JAX mirror of the PyTorch forward (gather formulation)."""
    B, Rmax, H, W = x.shape
    C = weight.shape[-1]
    x_blc = jnp.transpose(x, (0, 2, 3, 1)).reshape(B, H * W, Rmax)
    w = weight[indexes].reshape(B, H * W, Rmax, C)
    b = bias[indexes].reshape(B, H * W, C)
    y = jnp.squeeze(jnp.matmul(x_blc[:, :, None, :], w), axis=2) + b
    return jnp.transpose(y.reshape(B, H, W, C), (0, 3, 1, 2))


if __name__ == "__main__":
    # Module config (small, consistent with the PyTorch __init__)
    C = 32                                   # channel_num
    rate_choice = [4, 8, 16]
    rate_num = len(rate_choice)
    Rmax = max(rate_choice)

    B, H, W = 2, 16, 16
    L = B * H * W

    key = jax.random.PRNGKey(0)
    kx, kidx, kw, kb = jax.random.split(key, 4)

    # Deterministic parameter init mimicking the PyTorch init scheme:
    # kaiming_normal_(a=sqrt(5)) on (rate_num, Rmax, C): fan_in = Rmax * C
    gain = math.sqrt(2.0 / (1.0 + 5.0))
    std = gain / math.sqrt(Rmax * C)
    weight = std * jax.random.normal(kw, (rate_num, Rmax, C), dtype=jnp.float32)
    bound = 1.0 / math.sqrt(rate_num)
    bias = jax.random.uniform(kb, (rate_num, C), minval=-bound, maxval=bound,
                              dtype=jnp.float32)

    # Inputs: x is NCHW with Cin = max(rate_choice); indexes is one rate id per pixel.
    # NOTE: indexes must lie in [0, rate_num); out-of-range ids would yield zeros
    # here (masks all zero) instead of PyTorch's out-of-bounds gather.
    x = jax.random.normal(kx, (B, Rmax, H, W), dtype=jnp.float32)
    indexes = jax.random.randint(kidx, (L,), 0, rate_num, dtype=jnp.int32)

    out = rate_adaption_decoder(x, indexes, weight, bias)
    out = jax.block_until_ready(out)

    ref = _reference(x, indexes, weight, bias)
    assert out.shape == (B, C, H, W), out.shape
    assert jnp.allclose(out, ref, atol=1e-4, rtol=1e-4), "mismatch vs reference"

    print("KERNEL_OK")
</pallas_src>

<mosaic_0001>
module attributes {stable_mosaic.version = 11 : i64} {
  func.func @_rate_adaption_kernel(%arg0: i32, %arg1: i32, %arg2: memref<1x1x256xi32, #tpu.memory_space<vmem>>, %arg3: memref<1x16x256xf32, #tpu.memory_space<vmem>>, %arg4: memref<32x51xf32, #tpu.memory_space<vmem>>, %arg5: memref<1x32x256xf32, #tpu.memory_space<vmem>>) attributes {dimension_semantics = [#tpu.dimension_semantics<parallel>, #tpu.dimension_semantics<parallel>], iteration_bounds = array<i64: 2, 1>, scalar_prefetch = 0 : i64, scratch_operands = 0 : i64, tpu.core_type = #tpu.core_type<tc>, window_params = [{transform_indices = @transform_0, window_bounds = array<i64: 1, 1, 256>}, {transform_indices = @transform_1, window_bounds = array<i64: 1, 16, 256>}, {pipeline_mode = #tpu.pipeline_mode<synchronous>, transform_indices = @transform_2, window_bounds = array<i64: 32, 51>}, {transform_indices = @transform_3, window_bounds = array<i64: 1, 32, 256>}]} {
    %c0 = arith.constant 0 : index
    %c0_0 = arith.constant 0 : index
    %c0_1 = arith.constant 0 : index
    %0 = vector.load %arg3[%c0, %c0_0, %c0_1] : memref<1x16x256xf32, #tpu.memory_space<vmem>>, vector<1x16x256xf32>
    %1 = vector.shape_cast %0 : vector<1x16x256xf32> to vector<16x256xf32>
    %c0_2 = arith.constant 0 : index
    %c0_3 = arith.constant 0 : index
    %c0_4 = arith.constant 0 : index
    %2 = vector.load %arg2[%c0_2, %c0_3, %c0_4] : memref<1x1x256xi32, #tpu.memory_space<vmem>>, vector<1x1x256xi32>
    %3 = vector.shape_cast %2 : vector<1x1x256xi32> to vector<1x256xi32>
    %c0_5 = arith.constant 0 : index
    %c0_6 = arith.constant 0 : index
    %4 = vector.load %arg4[%c0_5, %c0_6] : memref<32x51xf32, #tpu.memory_space<vmem>>, vector<32x51xf32>
    %5 = tpu.iota {dimensions = array<i32: 0>} : vector<3x1x256xi32>
    %6 = vector.shape_cast %3 : vector<1x256xi32> to vector<1x1x256xi32>
    %7 = vector.broadcast %6 : vector<1x1x256xi32> to vector<3x1x256xi32>
    %8 = arith.cmpi eq, %7, %5 : vector<3x1x256xi32>
    %9 = arith.extui %8 : vector<3x1x256xi1> to vector<3x1x256xi32>
    %10 = arith.sitofp %9 : vector<3x1x256xi32> to vector<3x1x256xf32>
    %11 = vector.shape_cast %1 : vector<16x256xf32> to vector<1x16x256xf32>
    %12 = vector.broadcast %10 : vector<3x1x256xf32> to vector<3x16x256xf32>
    %13 = vector.broadcast %11 : vector<1x16x256xf32> to vector<3x16x256xf32>
    %14 = arith.mulf %12, %13 : vector<3x16x256xf32>
    %15 = vector.shape_cast %14 : vector<3x16x256xf32> to vector<48x256xf32>
    %16 = vector.shape_cast %10 : vector<3x1x256xf32> to vector<3x256xf32>
    %17 = tpu.concatenate %15, %16 in 0 : vector<48x256xf32>, vector<3x256xf32> -> vector<51x256xf32>
    %cst = arith.constant dense<0.000000e+00> : vector<32x256xf32>
    %18 = tpu.matmul %4, %17, %cst {dimension_numbers = #tpu.dot_dimension_numbers<[1], [0], [0], [1], [0, 0, 1, 1], [], []>} : vector<32x51xf32>, vector<51x256xf32>, vector<32x256xf32> -> vector<32x256xf32>
    %c0_7 = arith.constant 0 : index
    %c0_8 = arith.constant 0 : index
    %c0_9 = arith.constant 0 : index
    %19 = vector.load %arg5[%c0_7, %c0_8, %c0_9] : memref<1x32x256xf32, #tpu.memory_space<vmem>>, vector<1x32x256xf32>
    %20 = vector.shape_cast %19 : vector<1x32x256xf32> to vector<32x256xf32>
    %21 = vector.shape_cast %18 : vector<32x256xf32> to vector<1x32x256xf32>
    tpu.vector_store %arg5[%c0_7, %c0_8, %c0_9], %21 {strides = array<i32>} : memref<1x32x256xf32, #tpu.memory_space<vmem>>, vector<1x32x256xf32>,
    return
  }
  func.func @transform_0(%arg0: i32, %arg1: i32) -> (i32, i32, i32) {
    %c0_i32 = arith.constant 0 : i32
    %c0_i32_0 = arith.constant 0 : i32
    return %arg0, %c0_i32, %arg1 : i32, i32, i32
  }
  func.func @transform_1(%arg0: i32, %arg1: i32) -> (i32, i32, i32) {
    %c0_i32 = arith.constant 0 : i32
    %c0_i32_0 = arith.constant 0 : i32
    return %arg0, %c0_i32, %arg1 : i32, i32, i32
  }
  func.func @transform_2(%arg0: i32, %arg1: i32) -> (i32, i32) {
    %c0_i32 = arith.constant 0 : i32
    %c0_i32_0 = arith.constant 0 : i32
    %c0_i32_1 = arith.constant 0 : i32
    return %c0_i32, %c0_i32_0 : i32, i32
  }
  func.func @transform_3(%arg0: i32, %arg1: i32) -> (i32, i32, i32) {
    %c0_i32 = arith.constant 0 : i32
    %c0_i32_0 = arith.constant 0 : i32
    return %arg0, %c0_i32, %arg1 : i32, i32, i32
  }
}

</mosaic_0001>

<llo_original>
// kernel: tpu_custom_call.1
$region0: #{tpu_custom_call.1}
  #allocation0 [shape = 'u32[]', space=smem, size = 0x4, offset = 0x4, fixed_abs, tag = 'smem constant byte address 0x4 - core index']
  #allocation1 [shape = 'u32[144,128]{1,0:T(1,128)}', space=vmem, size = 0x12000, scoped, tag = 'internal scratch']
  %s0 = inlined_call_operand.hbm [shape: s32[2,1,256], index: 0, kind: input, shape index: {}]
  %s1 = inlined_call_operand.hbm [shape: f32[2,16,256], index: 1, kind: input, shape index: {}]
  %s2 = inlined_call_operand.hbm [shape: f32[32,51], index: 2, kind: input, shape index: {}]
  %s3 = inlined_call_operand.hbm [shape: f32[2,32,256], index: 3, kind: output, shape index: {}]
  %s4 = sld [smem:[#allocation0]]
  $region57: #{tpu_custom_call.1} parent=0
    _
  %s6 = ssub.s32 1, %s4
  %s7 = scalar_select 0, %s6, %s4
  $region1: #{tpu_custom_call.1} parent=0
    #allocation2 [shape = 'u8[2048]{0}', space=vmem, size = 0x800, scoped, tag = 'input window, operand 0']
    #allocation3 [shape = 's32[2]{0}', space=sflag, size = 0x8, scoped, tag = 'scoped memory for tpu_custom_call.1']
    #allocation4 [shape = 's32[2]{0}', space=sflag, size = 0x8, scoped, tag = 'scoped memory for tpu_custom_call.1']
    #allocation5 [shape = 'u8[32768]{0}', space=vmem, size = 0x8000, scoped, tag = 'input window, operand 1']
    #allocation6 [shape = 's32[2]{0}', space=sflag, size = 0x8, scoped, tag = 'scoped memory for tpu_custom_call.1']
    #allocation7 [shape = 'u8[16384]{0}', space=vmem, size = 0x4000, scoped, tag = 'input window, operand 2, single buffered']
    #allocation8 [shape = 'u8[65536]{0}', space=vmem, size = 0x10000, scoped, tag = 'output window, operand 0']
    %8 = vsyncpa [#allocation3], 0
    %s9 = scalar_lea.sflag [#allocation3], 1
    %10 = vsyncpa %s9, 0
    %11 = vsyncpa [#allocation6], 0
    %s12 = scalar_lea.sflag [#allocation6], 1
    %13 = vsyncpa %s12, 0
    %14 = vsyncpa [#allocation4], 0
    %s15 = scalar_lea.sflag [#allocation4], 1
    %16 = vsyncpa %s15, 0
    loop: start=0, step=1, limit=4
    $region2: #{tpu_custom_call.1} parent=1 // loop_pre_header
      _
    $region3: #{tpu_custom_call.1} parent=1 // loop_header
      %s18 = sphi 0, %s22
      %p19 = scmp.ge.s32.totalorder %s18, 4
      %s25 = sphi 0, %s37
      %s26 = sphi 0, %s33
      %s27 = sphi 0, %s25
      %s28 = sphi 0, %s26
      %s29 = sphi 0, %s27
      %s30 = sphi 0, %s28
      %s42 = sphi 0, %s44
      %s45 = sphi 0, %s42
      %s46 = sphi 0, %s45
      %s62 = sphi 0, %s46
      %s70 = sphi 0, %s72
      %s73 = sphi 0, %s70
      %s74 = sphi 0, %s73
      %s90 = sphi 0, %s74
      %s94 = sphi 0, %s94
      %s96 = sphi 0, %s94
      %s97 = sphi 0, %s96
      %s111 = sphi 0, %s97
      %s119 = sphi 0, %s121
      %s122 = sphi 0, %s119
      %s123 = sphi 0, %s122
      %s139 = sphi 0, %s123
    $region4: #{tpu_custom_call.1} parent=1 // loop_header_branch
      %21 = sbr.rel (%p19) target = $region8
    $region5: #{tpu_custom_call.1} parent=1 // loop_body
      %s23 = ssub.s32 %s18, 1
      %s24 = ssub.s32 %s18, 2
      %s31 = sadd.s32 1, %s26
      %p32 = scmp.ge.s32.totalorder %s31, 1
      %s33 = scalar_select %p32, 0, %s31
      %s34 = sadd.s32 1, %s25
      %s35 = scalar_select %p32, %s34, %s25
      %p36 = scmp.ge.s32.totalorder %s35, 2
      %s37 = scalar_select %p36, 0, %s35
      %s38 = ssub.s32 %s25, %s37
      %s39 = ssub.s32 %s26, %s33
      %s40 = sor.u32 %s38, %s39
      %p41 = scmp.eq.s32.totalorder %s40, 0
      %s43 = sadd.s32 %s42, 1
      %s44 = scalar_select %p41, %s42, %s43
      %p47 = pneg %p41
      %p48 = scmp.eq.s32.totalorder %s18, 1
      %p49 = por %p47, %p48
      %p50 = scmp.ne.s32.totalorder %s42, %s45
      %p51 = scmp.eq.s32.totalorder %s18, 0
      %p52 = por %p50, %p51
      %p53 = scmp.ne.s32.totalorder %s42, %s45
      %p54 = scmp.eq.s32.totalorder %s23, 1
      %p55 = por %p53, %p54
      %p56 = scmp.ne.s32.totalorder %s45, %s46
      %p57 = scmp.eq.s32.totalorder %s23, 0
      %p58 = por %p56, %p57
      %p59 = scmp.ne.s32.totalorder %s45, %s46
      %p60 = scmp.eq.s32.totalorder %s24, 1
      %p61 = por %p59, %p60
      %p63 = scmp.ne.s32.totalorder %s46, %s62
      %p64 = scmp.eq.s32.totalorder %s24, 0
      %p65 = por %p63, %p64
      %s66 = ssub.s32 %s25, %s37
      %s67 = ssub.s32 %s26, %s33
      %s68 = sor.u32 %s66, %s67
      %p69 = scmp.eq.s32.totalorder %s68, 0
      %s71 = sadd.s32 %s70, 1
      %s72 = scalar_select %p69, %s70, %s71
      %p75 = pneg %p69
      %p76 = scmp.eq.s32.totalorder %s18, 1
      %p77 = por %p75, %p76
      %p78 = scmp.ne.s32.totalorder %s70, %s73
      %p79 = scmp.eq.s32.totalorder %s18, 0
      %p80 = por %p78, %p79
      %p81 = scmp.ne.s32.totalorder %s70, %s73
      %p82 = scmp.eq.s32.totalorder %s23, 1
      %p83 = por %p81, %p82
      %p84 = scmp.ne.s32.totalorder %s73, %s74
      %p85 = scmp.eq.s32.totalorder %s23, 0
      %p86 = por %p84, %p85
      %p87 = scmp.ne.s32.totalorder %s73, %s74
      %p88 = scmp.eq.s32.totalorder %s24, 1
      %p89 = por %p87, %p88
      %p91 = scmp.ne.s32.totalorder %s74, %s90
      %p92 = scmp.eq.s32.totalorder %s24, 0
      %p93 = por %p91, %p92
      %s95 = sadd.s32 %s94, 1
      %p98 = scmp.eq.s32.totalorder %s18, 1
      %p99 = scmp.ne.s32.totalorder %s94, %s96
      %p100 = scmp.eq.s32.totalorder %s18, 0
      %p101 = por %p99, %p100
      %p102 = scmp.ne.s32.totalorder %s94, %s96
      %p103 = scmp.eq.s32.totalorder %s23, 1
      %p104 = por %p102, %p103
      %p105 = scmp.ne.s32.totalorder %s96, %s97
      %p106 = scmp.eq.s32.totalorder %s23, 0
      %p107 = por %p105, %p106
      %p108 = scmp.ne.s32.totalorder %s96, %s97
      %p109 = scmp.eq.s32.totalorder %s24, 1
      %p110 = por %p108, %p109
      %p112 = scmp.ne.s32.totalorder %s97, %s111
      %p113 = scmp.eq.s32.totalorder %s24, 0
      %p114 = por %p112, %p113
      %s115 = ssub.s32 %s25, %s37
      %s116 = ssub.s32 %s26, %s33
      %s117 = sor.u32 %s115, %s116
      %p118 = scmp.eq.s32.totalorder %s117, 0
      %s120 = sadd.s32 %s119, 1
      %s121 = scalar_select %p118, %s119, %s120
      %p124 = pneg %p118
      %p125 = scmp.eq.s32.totalorder %s18, 1
      %p126 = por %p124, %p125
      %p127 = scmp.ne.s32.totalorder %s119, %s122
      %p128 = scmp.eq.s32.totalorder %s18, 0
      %p129 = por %p127, %p128
      %p130 = scmp.ne.s32.totalorder %s119, %s122
      %p131 = scmp.eq.s32.totalorder %s23, 1
      %p132 = por %p130, %p131
      %p133 = scmp.ne.s32.totalorder %s122, %s123
      %p134 = scmp.eq.s32.totalorder %s23, 0
      %p135 = por %p133, %p134
      %p136 = scmp.ne.s32.totalorder %s122, %s123
      %p137 = scmp.eq.s32.totalorder %s24, 1
      %p138 = por %p136, %p137
      %p140 = scmp.ne.s32.totalorder %s123, %s139
      %p141 = scmp.eq.s32.totalorder %s24, 0
      %p142 = por %p140, %p141
      %p143 = scmp.le.s32.totalorder 1, %s18
      %p144 = scmp.lt.s32.totalorder %s18, 3
      %p145 = pnand %p143, %p144
      %p146 = pneg %p145
      // Predicated region
      $region9: #{tpu_custom_call.1} parent=5 // pred_check
        _
      $region10: #{tpu_custom_call.1} parent=5 // pred_check_branch
        %148 = sbr.rel (%p145) target = $region12
      $region11: #{tpu_custom_call.1} parent=5 // pred_region
        %s149 = ssub.s32 %s18, 1
        // Predicated region
        $region13: #{tpu_custom_call.1} parent=11 // pred_check
          %p150 = pneg %p107
        $region14: #{tpu_custom_call.1} parent=11 // pred_check_branch
          %152 = sbr.rel (%p150) target = $region16
        $region15: #{tpu_custom_call.1} parent=11 // pred_region
          %s154 = ssub.s32 512, 512
          %155 = vsyncadd [#allocation6], %s154
          %s156 = sshll.u32 [#allocation7], 4
          %s157 = int_to_ptr.vmem [resolvable:$true] %s156
          %162 = dma.hbm_to_vmem [thread:$0]  %s2, 512, %s157, [#allocation6], 128, 128, 8
        $region16: #{tpu_custom_call.1} parent=11 // pred_fallthru
          _
      $region12: #{tpu_custom_call.1} parent=5 // pred_fallthru
        _
      %p163 = scmp.lt.s32.totalorder %s18, 2
      // Predicated region
      $region17: #{tpu_custom_call.1} parent=5 // pred_check
        %p164 = pneg %p163
      $region18: #{tpu_custom_call.1} parent=5 // pred_check_branch
        %166 = sbr.rel (%p164) target = $region20
      $region19: #{tpu_custom_call.1} parent=5 // pred_region
        // Predicated region
        $region21: #{tpu_custom_call.1} parent=19 // pred_check
          %p167 = pneg %p52
        $region22: #{tpu_custom_call.1} parent=19 // pred_check_branch
          %169 = sbr.rel (%p167) target = $region24
        $region23: #{tpu_custom_call.1} parent=19 // pred_region
          %s170 = sand.u32 %s42, 1
          %s171 = scalar_lea.sflag [#allocation3], %s170
          %s172 = sand.u32 %s42, 1
          %s173 = smul.addr %s172, 2
          %s174 = scalar_lea.vmem [#allocation2], %s173
          %s175 = smul.u32 2, %s26
          %s177 = ssub.s32 32, 32
          %178 = vsyncadd %s171, %s177
          %s179 = smul.addr %s25, 2
          %s180 = sadd.s32 %s175, %s179
          %s181 = smul.addr %s180, 16
          %s182 = scalar_lea.hbm %s0, %s181
          %s184 = sshll.u32 %s174, 4
          %s185 = int_to_ptr.vmem [resolvable:$true] %s184
          %187 = dma.hbm_to_vmem [thread:$0]  %s182, 32, %s185, %s171
        $region24: #{tpu_custom_call.1} parent=19 // pred_fallthru
          _
        // Predicated region
        $region25: #{tpu_custom_call.1} parent=19 // pred_check
          %p188 = pneg %p80
        $region26: #{tpu_custom_call.1} parent=19 // pred_check_branch
          %190 = sbr.rel (%p188) target = $region28
        $region27: #{tpu_custom_call.1} parent=19 // pred_region
          %s191 = sand.u32 %s18, 1
          %s192 = scalar_lea.sflag [#allocation6], %s191
          %s193 = sand.u32 %s70, 1
          %s194 = smul.addr %s193, 32
          %s195 = scalar_lea.vmem [#allocation5], %s194
          %s196 = smul.u32 2, %s26
          %s198 = ssub.s32 512, 512
          %199 = vsyncadd %s192, %s198
          %s200 = smul.addr %s25, 4
          %s201 = sadd.s32 %s196, %s200
          %s202 = smul.addr %s201, 128
          %s203 = scalar_lea.hbm %s1, %s202
          %s204 = sshll.u32 %s195, 4
          %s205 = int_to_ptr.vmem [resolvable:$true] %s204
          %210 = dma.hbm_to_vmem [thread:$0]  %s203, 512, %s205, %s192, 256, 256, 16
        $region28: #{tpu_custom_call.1} parent=19 // pred_fallthru
          _
      $region20: #{tpu_custom_call.1} parent=5 // pred_fallthru
        _
      %p211 = scmp.le.s32.totalorder 1, %s18
      %p212 = scmp.lt.s32.totalorder %s18, 3
      %p213 = pnand %p211, %p212
      %p214 = pneg %p213
      // Predicated region
      $region29: #{tpu_custom_call.1} parent=5 // pred_check
        _
      $region30: #{tpu_custom_call.1} parent=5 // pred_check_branch
        %216 = sbr.rel (%p213) target = $region32
      $region31: #{tpu_custom_call.1} parent=5 // pred_region
        %s217 = ssub.s32 %s18, 1
        %s218 = sand.u32 %s45, 1
        %s219 = scalar_lea.sflag [#allocation3], %s218
        %s220 = sand.u32 %s45, 1
        %s221 = smul.addr %s220, 2
        %s222 = scalar_lea.vmem [#allocation2], %s221
        // Predicated region
        $region33: #{tpu_custom_call.1} parent=31 // pred_check
          %p223 = pneg %p58
        $region34: #{tpu_custom_call.1} parent=31 // pred_check_branch
          %225 = sbr.rel (%p223) target = $region36
        $region35: #{tpu_custom_call.1} parent=31 // pred_region
          %226 = dma.done %s219, 32
        $region36: #{tpu_custom_call.1} parent=31 // pred_fallthru
          _
        %s227 = sand.u32 %s23, 1
        %s228 = scalar_lea.sflag [#allocation6], %s227
        %s229 = sand.u32 %s73, 1
        %s230 = smul.addr %s229, 32
        %s231 = scalar_lea.vmem [#allocation5], %s230
        // Predicated region
        $region37: #{tpu_custom_call.1} parent=31 // pred_check
          %p232 = pneg %p86
        $region38: #{tpu_custom_call.1} parent=31 // pred_check_branch
          %234 = sbr.rel (%p232) target = $region40
        $region39: #{tpu_custom_call.1} parent=31 // pred_region
          %235 = dma.done %s228, 512
        $region40: #{tpu_custom_call.1} parent=31 // pred_fallthru
          _
        // Predicated region
        $region41: #{tpu_custom_call.1} parent=31 // pred_check
          %p236 = pneg %p107
        $region42: #{tpu_custom_call.1} parent=31 // pred_check_branch
          %238 = sbr.rel (%p236) target = $region44
        $region43: #{tpu_custom_call.1} parent=31 // pred_region
          %239 = dma.done [#allocation6], 512
        $region44: #{tpu_custom_call.1} parent=31 // pred_fallthru
          _
        %s240 = sand.u32 %s45, 1
        %s241 = scalar_lea.sflag [#allocation3], %s240
        %s242 = sand.u32 %s45, 1
        %s243 = smul.addr %s242, 2
        %s244 = scalar_lea.vmem [#allocation2], %s243
        %p245 = pneg %p58
        %p246 = pneg %p55
        %s247 = sand.u32 %s23, 1
        %s248 = scalar_lea.sflag [#allocation6], %s247
        %s249 = sand.u32 %s73, 1
        %s250 = smul.addr %s249, 32
        %s251 = scalar_lea.vmem [#allocation5], %s250
        %p252 = pneg %p86
        %p253 = pneg %p83
        %p254 = pneg %p107
        %p255 = pneg %p104
        %p256 = pneg %p135
        %p257 = pneg %p132
        %s258 = sand.u32 %s122, 1
        %s259 = scalar_lea.sflag [#allocation4], %s258
        %s260 = sand.u32 %s122, 1
        %s261 = smul.addr %s260, 64
        %s262 = scalar_lea.vmem [#allocation8], %s261
        %s263 = smul.u32 2, %s28
        %s264 = smul.u32 2, %s28
        %s265 = smul.u32 2, %s28
        %v266 = vld [vmem:[%s231] sm:$0xff]
        %v267 = vld [vmem:[%s231 + $0x8] sm:$0xff]
        %v268 = vld [vmem:[%s231 + $0x10] sm:$0xff]
        %v269 = vld [vmem:[%s231 + $0x18] sm:$0xff]
        %v270 = vld [vmem:[%s222] sm:$0x3]
        %v271 = vld [vmem:[#allocation7] sm:$0xff]
        %v272 = vld [vmem:[#allocation7 + $0x8] sm:$0xff]
        %v273 = vld [vmem:[#allocation7 + $0x10] sm:$0xff]
        %v274 = vld [vmem:[#allocation7 + $0x18] sm:$0xff]
        %vm275 = vcmp.eq.s32.totalorder %v270, 0
        %vm276 = vcmp.eq.s32.totalorder %v270, 1
        %vm277 = vcmp.eq.s32.totalorder %v270, 2
        %v278 = vsel %vm275, 1, 0
        %v279 = vsel %vm276, 1, 0
        %v280 = vsel %vm277, 1, 0
        %v281 = vcvt.s32.f32 %v278
        %v282 = vcvt.s32.f32 %v279
        %v283 = vcvt.s32.f32 %v280
        %v287 = vlaneseq
        %v288 = vshrl.u32 %v287, 7
        %v289 = vsub.s32 0, %v288
        %v290 = vrot.slane %v281, %v289
        %v291 = vlaneseq
        %v292 = vshrl.u32 %v291, 7
        %v293 = vsub.s32 1, %v292
        %v294 = vrot.slane %v281, %v293
        %v295 = vlaneseq
        %v296 = vshrl.u32 %v295, 7
        %v297 = vsub.s32 0, %v296
        %v298 = vrot.slane %v282, %v297
        %v299 = vlaneseq
        %v300 = vshrl.u32 %v299, 7
        %v301 = vsub.s32 1, %v300
        %v302 = vrot.slane %v282, %v301
        %v303 = vlaneseq
        %v304 = vshrl.u32 %v303, 7
        %v305 = vsub.s32 0, %v304
        %v306 = vrot.slane %v283, %v305
        %v307 = vlaneseq
        %v308 = vshrl.u32 %v307, 7
        %v309 = vsub.s32 1, %v308
        %v310 = vrot.slane %v283, %v309
        %v317 = vmul.f32 %v290, %v266
        %v318 = vmul.f32 %v294, %v267
        %v319 = vmul.f32 %v290, %v268
        %v320 = vmul.f32 %v294, %v269
        %v321 = vmul.f32 %v298, %v266
        %v322 = vmul.f32 %v302, %v267
        %v323 = vmul.f32 %v298, %v268
        %v324 = vmul.f32 %v302, %v269
        %v325 = vmul.f32 %v306, %v266
        %v326 = vmul.f32 %v310, %v267
        %v327 = vmul.f32 %v306, %v268
        %v328 = vmul.f32 %v310, %v269
        %v329 = vcombine.low %v281, %v282
        %v331 = vunpack.c.l.s4 1966171168
        %v332 = vunpack.c.0.s8 %v331
        %v333 = vlaneseq
        %v334 = vshrl.u32 %v333, 7
        %v335 = vsub.s32 %v332, %v334
        %v336 = vrot.slane %v329, %v335
        %v338 = vunpack.c.l.s4 1966171168
        %v339 = vunpack.c.0.s8 %v338
        %v340 = vlaneseq
        %v341 = vshrl.u32 %v340, 7
        %v342 = vsub.s32 %v339, %v341
        %v343 = vrot.slane %v283, %v342
        %v344 = vcombine.low %v336, %v343
        %v345 = vcombine.high %v336, %v343
        %v347 = vunpack.c.l.s4 1966171168
        %v348 = vunpack.c.0.s8 %v347
        %v349 = vlaneseq
        %v350 = vshrl.u32 %v349, 7
        %v351 = vsub.s32 %v348, %v350
        %v352 = vrot.slane %v344, %v351
        %v354 = vunpack.c.l.s4 1966171168
        %v355 = vunpack.c.0.s8 %v354
        %v356 = vlaneseq
        %v357 = vshrl.u32 %v356, 7
        %v358 = vsub.s32 %v355, %v357
        %v359 = vrot.slane %v345, %v358
        %vm360 = vcmask 416768
        %v362 = vsel %vm360, %v271, 0
        %v365 = vsel %vm360, %v272, 0
        %v368 = vsel %vm360, %v273, 0
        %v371 = vsel %vm360, %v274, 0
        %vm373 = vcmask 1042432
        %v374 = vsel %vm373, %v352, 0
        %v376 = vsel %vm373, %v359, 0
        %378 = vmatprep.subr.mxu0 0.0
        %379 = vmatpush1.msra.mxu0 0.0
        %380 = vmatprep.subr.mxu0 0.0
        %381 = vmatpush1.msra.mxu0 0.0
        %382 = vmatprep.subr.mxu0 0.0
        %383 = vmatpush1.msra.mxu0 0.0
        %384 = vmatprep.subr.mxu0 0.0
        %385 = vmatpush1.msra.mxu0 0.0
        %386 = vmatprep.subr.mxu0 0.0
        %387 = vmatpush1.msra.mxu0 0.0
        %388 = vmatprep.subr.mxu0 0.0
        %389 = vmatpush1.msra.mxu0 0.0
        %390 = vmatprep.subr.mxu0 0.0
        %391 = vmatpush1.msra.mxu0 0.0
        %392 = vmatprep.subr.mxu0 0.0
        %393 = vmatpush1.msra.mxu0 0.0
        %394 = vmatprep.subr.mxu0 0.0
        %395 = vmatpush1.msra.mxu0 0.0
        %396 = vmatprep.subr.mxu0 %v376
        %397 = vmatpush1.msra.mxu0 %v374
        %398 = vmatprep.subr.mxu0 %v328
        %399 = vmatpush1.msra.mxu0 %v327
        %400 = vmatprep.subr.mxu0 %v326
        %401 = vmatpush1.msra.mxu0 %v325
        %402 = vmatprep.subr.mxu0 %v324
        %403 = vmatpush1.msra.mxu0 %v323
        %404 = vmatprep.subr.mxu0 %v322
        %405 = vmatpush1.msra.mxu0 %v321
        %406 = vmatprep.subr.mxu0 %v320
        %407 = vmatpush1.msra.mxu0 %v319
        %408 = vmatprep.subr.mxu0 %v318
        %409 = vmatpush1.msra.mxu0 %v317
        %410 = vmatprep.subr.mxu0 0.0
        %411 = vmatpush2.msra.mxu0 0.0
        %412 = vmatprep.subr.mxu0 0.0
        %413 = vmatpush2.msra.mxu0 0.0
        %414 = vmatprep.subr.mxu0 0.0
        %415 = vmatpush2.msra.mxu0 0.0
        %416 = vmatprep.subr.mxu0 0.0
        %417 = vmatpush2.msra.mxu0 0.0
        %418 = vmatprep.subr.mxu0 0.0
        %419 = vmatpush2.msra.mxu0 0.0
        %420 = vmatprep.subr.mxu0 0.0
        %421 = vmatpush2.msra.mxu0 0.0
        %422 = vmatprep.subr.mxu0 0.0
        %423 = vmatpush2.msra.mxu0 0.0
        %424 = vmatprep.subr.mxu0 0.0
        %425 = vmatpush2.msra.mxu0 0.0
        %426 = vmatprep.subr.mxu0 0.0
        %427 = vmatpush2.msra.mxu0 0.0
        %428 = vmatprep.subr.mxu0 0.0
        %429 = vmatpush2.msra.mxu0 0.0
        %430 = vmatprep.subr.mxu0 0.0
        %431 = vmatpush2.msra.mxu0 0.0
        %432 = vmatprep.subr.mxu0 0.0
        %433 = vmatpush2.msra.mxu0 0.0
        %434 = vmatprep.subr.mxu0 0.0
        %435 = vmatpush2.msra.mxu0 0.0
        %436 = vmatprep.subr.mxu0 0.0
        %437 = vmatpush2.msra.mxu0 0.0
        %438 = vmatprep.subr.mxu0 0.0
        %439 = vmatpush2.msra.mxu0 0.0
        %440 = vmatprep.subr.mxu0 0.0
        %441 = vmatpush2.msra.mxu0 0.0
        %442 = vmatprep.mubr.f32.mxu0 0.0
        %443 = vmatmul.mubr.f32.gmra.mxu0 %v362
        %v444 = vpop.f32.mrf.mxu0
        %v445 = vadd.f32 0.0, %v444
        %v446 = vpop.f32.mrf.mxu0
        %v447 = vadd.f32 0.0, %v446
        %448 = vmatprep.mubr.f32.mxu0 0.0
        %449 = vmatmul.mubr.f32.gmra.mxu0 %v365
        %v450 = vpop.f32.mrf.mxu0
        %v451 = vadd.f32 0.0, %v450
        %v452 = vpop.f32.mrf.mxu0
        %v453 = vadd.f32 0.0, %v452
        %454 = vmatprep.mubr.f32.mxu0 0.0
        %455 = vmatmul.mubr.f32.gmra.mxu0 %v368
        %v456 = vpop.f32.mrf.mxu0
        %v457 = vadd.f32 0.0, %v456
        %v458 = vpop.f32.mrf.mxu0
        %v459 = vadd.f32 0.0, %v458
        %460 = vmatprep.mubr.f32.mxu0 0.0
        %461 = vmatmul.mubr.f32.gmra.mxu0 %v371
        %v462 = vpop.f32.mrf.mxu0
        %v463 = vadd.f32 0.0, %v462
        %v464 = vpop.f32.mrf.mxu0
        %v465 = vadd.f32 0.0, %v464
        %466 = vdwg.mxu0
        %467 = vst [vmem:[%s262] sm:$0xff] %v445
        %468 = vst [vmem:[%s262 + $0x8] sm:$0xff] %v447
        %469 = vst [vmem:[%s262 + $0x10] sm:$0xff] %v451
        %470 = vst [vmem:[%s262 + $0x18] sm:$0xff] %v453
        %471 = vst [vmem:[%s262 + $0x20] sm:$0xff] %v457
        %472 = vst [vmem:[%s262 + $0x28] sm:$0xff] %v459
        %473 = vst [vmem:[%s262 + $0x30] sm:$0xff] %v463
        %474 = vst [vmem:[%s262 + $0x38] sm:$0xff] %v465
        %s475 = sand.u32 %s122, 1
        %s476 = scalar_lea.sflag [#allocation4], %s475
        %s477 = sand.u32 %s122, 1
        %s478 = smul.addr %s477, 64
        %s479 = scalar_lea.vmem [#allocation8], %s478
        // Predicated region
        $region45: #{tpu_custom_call.1} parent=31 // pred_check
          %p480 = pneg %p132
        $region46: #{tpu_custom_call.1} parent=31 // pred_check_branch
          %482 = sbr.rel (%p480) target = $region48
        $region47: #{tpu_custom_call.1} parent=31 // pred_region
          %s483 = smul.u32 2, %s28
          %s485 = ssub.s32 1024, 1024
          %486 = vsyncadd %s476, %s485
          %s487 = smul.addr %s27, 8
          %s488 = sadd.s32 %s483, %s487
          %s489 = smul.addr %s488, 128
          %s490 = scalar_lea.hbm %s3, %s489
          %s491 = sshll.u32 %s479, 4
          %s492 = int_to_ptr.vmem [resolvable:$true] %s491
          %497 = dma.vmem_to_hbm [thread:$0]  %s492, 1024, %s490, %s476, 256, 256, 16
        $region48: #{tpu_custom_call.1} parent=31 // pred_fallthru
          _
      $region32: #{tpu_custom_call.1} parent=5 // pred_fallthru
        _
      %p498 = scmp.le.s32.totalorder 2, %s18
      // Predicated region
      $region49: #{tpu_custom_call.1} parent=5 // pred_check
        %p499 = pneg %p498
      $region50: #{tpu_custom_call.1} parent=5 // pred_check_branch
        %501 = sbr.rel (%p499) target = $region52
      $region51: #{tpu_custom_call.1} parent=5 // pred_region
        %s502 = ssub.s32 %s18, 2
        // Predicated region
        $region53: #{tpu_custom_call.1} parent=51 // pred_check
          %p503 = pneg %p138
        $region54: #{tpu_custom_call.1} parent=51 // pred_check_branch
          %505 = sbr.rel (%p503) target = $region56
        $region55: #{tpu_custom_call.1} parent=51 // pred_region
          %s506 = sand.u32 %s123, 1
          %s507 = scalar_lea.sflag [#allocation4], %s506
          %s508 = sand.u32 %s123, 1
          %s509 = smul.addr %s508, 64
          %s510 = scalar_lea.vmem [#allocation8], %s509
          %511 = dma.done %s507, 1024
        $region56: #{tpu_custom_call.1} parent=51 // pred_fallthru
          _
      $region52: #{tpu_custom_call.1} parent=5 // pred_fallthru
        _
    $region6: #{tpu_custom_call.1} parent=1 // loop_footer
      %s22 = sadd.s32 1, %s18
    $region7: #{tpu_custom_call.1} parent=1 // loop_footer_branch
      %17 = sbr.rel target = $region3
    $region8: #{tpu_custom_call.1} parent=1 // loop_exit
      _
    %512 = vsyncpa [#allocation3], 1
    %s513 = scalar_lea.sflag [#allocation3], 1
    %514 = vsyncpa %s513, 1
    %515 = vsyncpa [#allocation6], 1
    %s516 = scalar_lea.sflag [#allocation6], 1
    %517 = vsyncpa %s516, 1
    %518 = vsyncpa [#allocation4], 1
    %s519 = scalar_lea.sflag [#allocation4], 1
    %520 = vsyncpa %s519, 1

</llo_original>
